<compile_context>
chip_gen: v7x
topology: tpu7x:2x2x1
jax: 0.10.0
libtpu: 0.0.40
codegen_flags: <defaults>
</compile_context>

<pallas_src>
import functools
import math

import numpy as np
import jax
import jax.numpy as jnp
from jax.experimental import pallas as pl
from jax.experimental.pallas import tpu as pltpu


# ----------------------------- hashing helpers ----------------------------- #

_M1 = np.uint32(0x7FEB352D)
_M2 = np.uint32(0x846CA68B)
_GOLDEN = np.uint32(0x9E3779B9)


def _hash32(x):
    """lowbias32-style integer mixer (uint32 -> uint32), pure VPU ops."""
    x = x ^ (x >> 16)
    x = x * _M1
    x = x ^ (x >> 15)
    x = x * _M2
    x = x ^ (x >> 16)
    return x


def _global_ids(shape, row0_u32):
    """Global flat element index for this block (grid/tile invariant)."""
    r = jax.lax.broadcasted_iota(jnp.uint32, shape, 0) + row0_u32
    if len(shape) == 2:
        c = jax.lax.broadcasted_iota(jnp.uint32, shape, 1)
        return r * np.uint32(shape[1]) + c
    b = jax.lax.broadcasted_iota(jnp.uint32, shape, 1)
    j = jax.lax.broadcasted_iota(jnp.uint32, shape, 2)
    return (r * np.uint32(shape[1]) + b) * np.uint32(shape[2]) + j


# --------------------------------- kernels --------------------------------- #

def _pe_add_kernel(x_ref, pe_ref, o_ref, *, bs):
    """out = x + pe (eval mode). pe broadcasts over batch (in-register)."""
    x = x_ref[...]
    pe = pe_ref[...].astype(x.dtype)
    if x.ndim == 2:                      # flat (seq, bs*d) layout: tile pe over batch
        pe = jnp.tile(pe, (1, bs))
    o_ref[...] = (x + pe).astype(o_ref.dtype)


def _pe_add_dropout_kernel(seed_ref, x_ref, pe_ref, o_ref, *, bs, keep_prob):
    """out = inverted-dropout(x + pe), fused, counter-hash PRNG (training mode)."""
    x = x_ref[...]
    pe = pe_ref[...].astype(x.dtype)
    if x.ndim == 2:
        pe = jnp.tile(pe, (1, bs))
    y = x + pe

    ts = x.shape[0]
    row0 = (pl.program_id(0) * ts).astype(jnp.uint32)
    gid = _global_ids(y.shape, row0)
    seed = seed_ref[0].astype(jnp.uint32)
    bits = _hash32(gid + seed * _GOLDEN)

    # top 23 bits -> uniform integer in [0, 2^23); keep iff below threshold
    thresh = np.uint32(int(round(keep_prob * float(1 << 23))))
    keep = (bits >> 9) < thresh

    scale = jnp.asarray(1.0 / keep_prob if keep_prob > 0.0 else 0.0, dtype=y.dtype)
    o_ref[...] = jnp.where(keep, y * scale, jnp.zeros_like(y)).astype(o_ref.dtype)


# --------------------------------- wrapper ---------------------------------- #

def _choose_tile(seq, row_bytes, target_block_bytes=4 * 1024 * 1024):
    """Rows per block: ~4 MiB blocks, multiple of 8 rows, preferring a divisor
    of seq so every DMA step is the same size (no ragged tail)."""
    ts = max(1, target_block_bytes // max(row_bytes, 1))
    if ts >= seq:
        return seq
    ts = max(8, (ts // 8) * 8)
    lo = max(8, ts - 256)
    for cand in range(ts, lo - 1, -8):
        if seq % cand == 0:
            return cand
    return ts


def _pe_forward(x, pe, seed, *, keep_prob, training):
    seq, bs, d = x.shape
    # lane-dense layout when the natural (bs, d) trailing block would waste
    # sublanes/lanes (bs < 8 or d not a multiple of 128)
    flat = (bs < 8) or (d % 128 != 0)

    ts = _choose_tile(seq, bs * d * x.dtype.itemsize)
    nblk = pl.cdiv(seq, ts)

    cparams = pltpu.CompilerParams(
        dimension_semantics=("parallel",),
        vmem_limit_bytes=48 * 1024 * 1024,
    )

    if flat:
        x_in = x.reshape(seq, bs * d)                 # free (contiguous) view
        pe_in = pe.reshape(pe.shape[0], d)            # (max_len, d)
        x_spec = pl.BlockSpec((ts, bs * d), lambda i, *_: (i, 0))
        pe_spec = pl.BlockSpec((ts, d), lambda i, *_: (i, 0))
        out_shape = jax.ShapeDtypeStruct((seq, bs * d), x.dtype)
    else:
        x_in = x
        pe_in = pe                                    # (max_len, 1, d)
        x_spec = pl.BlockSpec((ts, bs, d), lambda i, *_: (i, 0, 0))
        pe_spec = pl.BlockSpec((ts, 1, d), lambda i, *_: (i, 0, 0))
        out_shape = jax.ShapeDtypeStruct((seq, bs, d), x.dtype)

    if (not training) or keep_prob >= 1.0:
        # Eval mode: dropout is identity -> plain fused add.
        out = pl.pallas_call(
            functools.partial(_pe_add_kernel, bs=bs),
            out_shape=out_shape,
            grid=(nblk,),
            in_specs=[x_spec, pe_spec],
            out_specs=x_spec,
            compiler_params=cparams,
        )(x_in, pe_in)
    else:
        # Training mode: fused add + dropout; seed via scalar prefetch (SMEM).
        kernel = functools.partial(_pe_add_dropout_kernel, bs=bs, keep_prob=keep_prob)
        grid_spec = pltpu.PrefetchScalarGridSpec(
            num_scalar_prefetch=1,
            grid=(nblk,),
            in_specs=[x_spec, pe_spec],
            out_specs=x_spec,
        )
        out = pl.pallas_call(
            kernel,
            out_shape=out_shape,
            grid_spec=grid_spec,
            compiler_params=cparams,
        )(seed, x_in, pe_in)

    return out.reshape(seq, bs, d) if flat else out


@functools.partial(jax.jit, static_argnames=("keep_prob", "training"))
def _pe_forward_jit(x, pe, seed, *, keep_prob, training):
    return _pe_forward(x, pe, seed, keep_prob=keep_prob, training=training)


class PositionalEncodingPallas:
    """JAX/Pallas re-implementation of PositionalEncoding.forward."""

    def __init__(self, d_model, dropout=0.1, max_len=5000):
        assert d_model % 2 == 0, "d_model must be even (matches the sin/cos split)"
        self.d_model = d_model
        self.p = float(dropout)
        self.max_len = max_len

        position = jnp.arange(max_len, dtype=jnp.float32)[:, None]
        div_term = jnp.exp(
            jnp.arange(0, d_model, 2, dtype=jnp.float32)
            * (-math.log(10000.0) / d_model)
        )
        pe = jnp.zeros((max_len, d_model), jnp.float32)
        pe = pe.at[:, 0::2].set(jnp.sin(position * div_term))
        pe = pe.at[:, 1::2].set(jnp.cos(position * div_term))
        # Same layout as the torch buffer: (max_len, 1, d_model).
        self.pe = pe[:, None, :]

    def __call__(self, x, *, training=False, rng_seed=0):
        seed = jnp.asarray([rng_seed], dtype=jnp.int32)
        return _pe_forward_jit(
            x, self.pe, seed,
            keep_prob=1.0 - self.p, training=bool(training),
        )


# ------------------------------ demo / test -------------------------------- #

if __name__ == "__main__":
    # Small shape (bs < 8, d % 128 != 0) -> exercises the lane-dense flat path.
    seq, bs, d_model = 8, 2, 32
    key = jax.random.PRNGKey(0)
    x = jax.random.normal(key, (seq, bs, d_model), jnp.float32)

    mod = PositionalEncodingPallas(d_model, dropout=0.1, max_len=5000)

    # Eval mode (dropout = identity) — check against pure-JAX reference.
    out = jax.block_until_ready(mod(x))
    ref = x + mod.pe[:seq]
    assert out.shape == (seq, bs, d_model)
    assert jnp.allclose(out, ref, atol=1e-6, rtol=1e-6)

    # Training mode (fused in-kernel dropout): each element must equal either 0
    # (dropped) or (x + pe)/keep_prob (kept).
    out_tr = jax.block_until_ready(mod(x, training=True, rng_seed=123))
    keep_prob = 1.0 - 0.1
    scaled = ref / keep_prob
    ok = jnp.isclose(out_tr, 0.0, atol=1e-6) | jnp.isclose(out_tr, scaled, atol=1e-5, rtol=1e-5)
    assert bool(jnp.all(ok))
    n_zero = int(jnp.sum(out_tr == 0.0))
    assert 0 < n_zero < out_tr.size          # some dropped, not all

    # Batched / lane-aligned shape (bs >= 8, d % 128 == 0) -> exercises the 3-D path.
    mod2 = PositionalEncodingPallas(128, dropout=0.1, max_len=64)
    x2 = jax.random.normal(jax.random.PRNGKey(1), (16, 8, 128), jnp.float32)
    ref2 = x2 + mod2.pe[:16]
    out2 = jax.block_until_ready(mod2(x2))
    assert jnp.allclose(out2, ref2, atol=1e-6, rtol=1e-6)
    out2_tr = jax.block_until_ready(mod2(x2, training=True, rng_seed=7))
    scaled2 = ref2 / keep_prob
    ok2 = jnp.isclose(out2_tr, 0.0, atol=1e-6) | jnp.isclose(out2_tr, scaled2, atol=1e-5, rtol=1e-5)
    assert bool(jnp.all(ok2))

    print("KERNEL_OK")
</pallas_src>

<mosaic_0001>
module attributes {stable_mosaic.version = 11 : i64} {
  func.func @_pe_add_kernel(%arg0: i32, %arg1: memref<8x64xf32, #tpu.memory_space<vmem>>, %arg2: memref<8x32xf32, #tpu.memory_space<vmem>>, %arg3: memref<8x64xf32, #tpu.memory_space<vmem>>) attributes {dimension_semantics = [#tpu.dimension_semantics<parallel>], iteration_bounds = array<i64: 1>, scalar_prefetch = 0 : i64, scratch_operands = 0 : i64, tpu.core_type = #tpu.core_type<tc>, window_params = [{transform_indices = @transform_0, window_bounds = array<i64: 8, 64>}, {transform_indices = @transform_1, window_bounds = array<i64: 8, 32>}, {transform_indices = @transform_2, window_bounds = array<i64: 8, 64>}]} {
    %c0 = arith.constant 0 : index
    %c0_0 = arith.constant 0 : index
    %0 = vector.load %arg1[%c0, %c0_0] : memref<8x64xf32, #tpu.memory_space<vmem>>, vector<8x64xf32>
    %c0_1 = arith.constant 0 : index
    %c0_2 = arith.constant 0 : index
    %1 = vector.load %arg2[%c0_1, %c0_2] : memref<8x32xf32, #tpu.memory_space<vmem>>, vector<8x32xf32>
    %2 = tpu.concatenate %1, %1 in 1 : vector<8x32xf32>, vector<8x32xf32> -> vector<8x64xf32>
    %3 = arith.addf %0, %2 : vector<8x64xf32>
    %c0_3 = arith.constant 0 : index
    %c0_4 = arith.constant 0 : index
    %4 = vector.load %arg3[%c0_3, %c0_4] : memref<8x64xf32, #tpu.memory_space<vmem>>, vector<8x64xf32>
    tpu.vector_store %arg3[%c0_3, %c0_4], %3 {strides = array<i32>} : memref<8x64xf32, #tpu.memory_space<vmem>>, vector<8x64xf32>,
    return
  }
  func.func @transform_0(%arg0: i32) -> (i32, i32) {
    %c0_i32 = arith.constant 0 : i32
    %c0_i32_0 = arith.constant 0 : i32
    return %arg0, %c0_i32 : i32, i32
  }
  func.func @transform_1(%arg0: i32) -> (i32, i32) {
    %c0_i32 = arith.constant 0 : i32
    %c0_i32_0 = arith.constant 0 : i32
    return %arg0, %c0_i32 : i32, i32
  }
  func.func @transform_2(%arg0: i32) -> (i32, i32) {
    %c0_i32 = arith.constant 0 : i32
    %c0_i32_0 = arith.constant 0 : i32
    return %arg0, %c0_i32 : i32, i32
  }
}

</mosaic_0001>

<llo_original>
// kernel: _pe_forward_jit.1
$region0: #{_pe_forward_jit.1}
  #allocation0 [shape = 'u32[]', space=smem, size = 0x4, offset = 0x4, fixed_abs, tag = 'smem constant byte address 0x4 - core index']
  #allocation1 [shape = 'u32[144,128]{1,0:T(1,128)}', space=vmem, size = 0x12000, scoped, tag = 'internal scratch']
  %s0 = inlined_call_operand.vmem [shape: f32[8,64], index: 0, kind: input, shape index: {}]
  %s1 = inlined_call_operand.vmem [shape: f32[5000,32], index: 1, kind: input, shape index: {}]
  %s2 = inlined_call_operand.vmem [shape: f32[8,64], index: 2, kind: output, shape index: {}]
  %s3 = sld [smem:[#allocation0]]
  $region18: #{_pe_forward_jit.1} parent=0
    _
  %s5 = ssub.s32 1, %s3
  %s6 = scalar_select 0, %s5, %s3
  // Predicated region
  $region2: #{_pe_forward_jit.1} parent=0 // pred_check
    _
  $region3: #{_pe_forward_jit.1} parent=0 // pred_check_branch
    %8 = sbr.rel (0) target = $region5
  $region4: #{_pe_forward_jit.1} parent=0 // pred_region
    _
  $region5: #{_pe_forward_jit.1} parent=0 // pred_fallthru
    _
  // Predicated region
  $region6: #{_pe_forward_jit.1} parent=0 // pred_check
    _
  $region7: #{_pe_forward_jit.1} parent=0 // pred_check_branch
    %10 = sbr.rel (0) target = $region9
  $region8: #{_pe_forward_jit.1} parent=0 // pred_region
    _
  $region9: #{_pe_forward_jit.1} parent=0 // pred_fallthru
    _
  %v11 = vld [vmem:[%s0] sm:$0xff]
  %v12 = vld [vmem:[%s1] sm:$0xff]
  %14 = vrot.lane.b32.xlu0 %v12, 32
  %v15 = vpop.permute.xlu0 %14
  %vm17 = vcmask 261120
  %v18 = vsel %vm17, %v12, %v15
  %v19 = vadd.f32 %v11, %v18
  %vm20 = vcmask 523264
  %21 = vst.msk [vmem:[%s2] sm:$0xff] %vm20, %v19
  // Predicated region
  $region10: #{_pe_forward_jit.1} parent=0 // pred_check
    _
  $region11: #{_pe_forward_jit.1} parent=0 // pred_check_branch
    %23 = sbr.rel (0) target = $region13
  $region12: #{_pe_forward_jit.1} parent=0 // pred_region
    _
  $region13: #{_pe_forward_jit.1} parent=0 // pred_fallthru
    _
  // Predicated region
  $region14: #{_pe_forward_jit.1} parent=0 // pred_check
    _
  $region15: #{_pe_forward_jit.1} parent=0 // pred_check_branch
    %25 = sbr.rel (0) target = $region17
  $region16: #{_pe_forward_jit.1} parent=0 // pred_region
    _
  $region17: #{_pe_forward_jit.1} parent=0 // pred_fallthru
    _

</llo_original>
